<compile_context>
chip_gen: v7x
topology: tpu7x:2x2x1
jax: 0.10.0
libtpu: 0.0.40
codegen_flags: <defaults>
</compile_context>

<pallas_src>
import functools

import jax
import jax.numpy as jnp
from jax.experimental import pallas as pl
from jax.experimental.pallas import tpu as pltpu

RADIUS = 3.5
EPS_NORM = 1e-12    # F.normalize default eps
D_SCALE = 1e-6      # scale of the initial random perturbation


def _round_up(n, m):
    return ((n + m - 1) // m) * m


def _vat_kernel(x_ref, d_ref, p_ref, w_ref, b_ref, out_ref, *, valid_rows):
    x = x_ref[...]                     # [TB, F] f32
    d = d_ref[...]                     # [TB, F] f32 uniform noise (torch.rand_like)
    p = p_ref[...]                     # [TB, K] f32 target logits
    w = w_ref[...]                     # [F, K]  bf16 combined weight (We @ Wc)
    b = b_ref[...]                     # [1, K]  f32 combined bias    (be @ Wc + bc)

    tb = x.shape[0]

    # Mask for padded batch rows (they contribute zero loss).
    row = (jax.lax.broadcasted_iota(jnp.int32, (tb, 1), 0)
           + pl.program_id(0) * tb)
    valid = (row < valid_rows).astype(jnp.float32)                     # [TB, 1]

    # --- d = 1e-6 * F.normalize(rand_like(x), p=2, dim=1) -----------------
    d_sq = jnp.sum(d * d, axis=1, keepdims=True)
    inv_dn = jax.lax.rsqrt(jnp.maximum(d_sq, EPS_NORM * EPS_NORM))     # 1/max(||d||,eps)
    x_eps = x + d * (D_SCALE * inv_dn)

    # --- forward on perturbed input (fused encoder + classifier) ----------
    logits = jnp.dot(x_eps.astype(jnp.bfloat16), w,
                     preferred_element_type=jnp.float32) + b           # [TB, K]

    # --- target_p = softmax(p, dim=1) (p is detached / constant) ----------
    p_exp = jnp.exp(p - jnp.max(p, axis=1, keepdims=True))
    target_p = p_exp * pl.reciprocal(
        jnp.sum(p_exp, axis=1, keepdims=True), approx=True)            # [TB, K]

    # --- analytic grad of CondEntropyLoss(mean) w.r.t. the logits ---------
    # dloss/dlogits = (softmax(logits) - target_p) / B ; the 1/B factor is
    # dropped because the gradient is L2-normalized right below.
    l_exp = jnp.exp(logits - jnp.max(logits, axis=1, keepdims=True))
    l_soft = l_exp * pl.reciprocal(
        jnp.sum(l_exp, axis=1, keepdims=True), approx=True)
    g_logits = l_soft - target_p                                       # [TB, K]

    # --- backprop through the folded linear layer: grad w.r.t. d ----------
    # Contract on the class axis of Wcomb -> no transposed weight copy.
    g_x = jax.lax.dot_general(
        g_logits.astype(jnp.bfloat16), w,
        dimension_numbers=(((1,), (1,)), ((), ())),
        preferred_element_type=jnp.float32)                            # [TB, F]

    # --- eps_adv = R * normalize(grad); x_adv = x + eps_adv * R -----------
    # (radius is applied twice -> magnitude R^2, exactly as in the reference)
    g_sq = jnp.sum(g_x * g_x, axis=1, keepdims=True)
    inv_gn = jax.lax.rsqrt(jnp.maximum(g_sq, EPS_NORM * EPS_NORM))
    x_adv = x + g_x * ((RADIUS * RADIUS) * inv_gn)

    # --- final forward pass + CondEntropyLoss (per-sample, un-reduced) ----
    logits2 = jnp.dot(x_adv.astype(jnp.bfloat16), w,
                      preferred_element_type=jnp.float32) + b          # [TB, K]
    shifted = logits2 - jnp.max(logits2, axis=1, keepdims=True)
    lse = jnp.log(jnp.sum(jnp.exp(shifted), axis=1, keepdims=True))
    log_p = shifted - lse                                              # log_softmax
    per_sample = -jnp.sum(log_p * target_p, axis=1, keepdims=True)     # [TB, 1]

    out_ref[...] = per_sample * valid


def vat_loss(x_nchw, p, d_noise, We, be, Wc, bc, *, block_b=None):
    """VATLoss.forward with synthetic linear generator/classifier.

    x_nchw : [B, C, H, W]  input batch
    p      : [B, K]        target logits (treated as detached)
    d_noise: like x_nchw   uniform [0,1) noise (stands in for torch.rand_like)
    We, be : generator/encoder linear layer   flatten(x) @ We + be
    Wc, bc : classifier linear layer          hidden    @ Wc + bc
    """
    B = x_nchw.shape[0]
    Fdim = 1
    for s in x_nchw.shape[1:]:
        Fdim *= int(s)
    K = p.shape[-1]

    # Fold the two linear layers (exact up to f32 rounding; bf16 only at the
    # MXU inputs).  In real use, jit this wrapper so the fold is hoisted.
    We32 = We.astype(jnp.float32)
    Wc32 = Wc.astype(jnp.float32)
    w_comb = jnp.dot(We32, Wc32).astype(jnp.bfloat16)                  # [F, K]
    b_comb = (jnp.dot(be.astype(jnp.float32).reshape(1, -1), Wc32)
              + bc.astype(jnp.float32).reshape(1, -1))                 # [1, K]

    x_flat = x_nchw.reshape(B, Fdim).astype(jnp.float32)
    d_flat = d_noise.reshape(B, Fdim).astype(jnp.float32)
    p32 = p.astype(jnp.float32)

    # Batch tiling: pad to a multiple of 8 sublanes; cap the tile at 128 rows
    # so one tile fills the MXU M dimension while x/d tiles stay well inside
    # v7x's 64 MiB VMEM even with double-buffering.
    # TODO(synk): very large feature dims (e.g. 3*224*224) would additionally
    # need a feature-axis grid; not required for this module's shapes.
    if block_b is None:
        block_b = min(128, _round_up(B, 8))
    Bp = _round_up(B, block_b)
    if Bp != B:
        pad = Bp - B
        x_flat = jnp.pad(x_flat, ((0, pad), (0, 0)))
        d_flat = jnp.pad(d_flat, ((0, pad), (0, 0)))
        p32 = jnp.pad(p32, ((0, pad), (0, 0)))
    num_tiles = Bp // block_b

    per_sample = pl.pallas_call(
        functools.partial(_vat_kernel, valid_rows=B),
        out_shape=jax.ShapeDtypeStruct((Bp, 1), jnp.float32),
        grid=(num_tiles,),
        in_specs=[
            pl.BlockSpec((block_b, Fdim), lambda i: (i, 0)),   # x tile
            pl.BlockSpec((block_b, Fdim), lambda i: (i, 0)),   # noise tile
            pl.BlockSpec((block_b, K), lambda i: (i, 0)),      # target logits
            pl.BlockSpec((Fdim, K), lambda i: (0, 0)),         # folded weight
            pl.BlockSpec((1, K), lambda i: (0, 0)),            # folded bias
        ],
        out_specs=pl.BlockSpec((block_b, 1), lambda i: (i, 0)),
        compiler_params=pltpu.CompilerParams(
            dimension_semantics=("parallel",)),                # both TCs on v7x
    )(x_flat, d_flat, p32, w_comb, b_comb)

    # Mean over the real batch (padded rows were masked to zero in-kernel).
    return jnp.sum(per_sample) / B


if __name__ == "__main__":
    key = jax.random.PRNGKey(0)
    k_x, k_p, k_d, k_we, k_wc = jax.random.split(key, 5)

    B, C, H, W = 2, 4, 16, 16
    F = C * H * W          # 1024 flattened features
    D = 32                 # encoder hidden size
    K = 16                 # number of classes

    x = jax.random.normal(k_x, (B, C, H, W), dtype=jnp.float32)
    p = jax.random.normal(k_p, (B, K), dtype=jnp.float32)               # target logits
    d_noise = jax.random.uniform(k_d, (B, C, H, W), dtype=jnp.float32)  # ~ torch.rand_like(x)

    # deterministic synthetic parameters (encoder + classifier linear layers)
    # TODO(synk): arbitrary non-linear classifier/generator sub-modules (and
    # autograd through them) have no clean single-kernel equivalent; they are
    # instantiated as linear layers with a closed-form perturbation gradient.
    We = 0.02 * jax.random.normal(k_we, (F, D), dtype=jnp.float32)
    be = jnp.zeros((D,), dtype=jnp.float32)
    Wc = 0.1 * jax.random.normal(k_wc, (D, K), dtype=jnp.float32)
    bc = jnp.zeros((K,), dtype=jnp.float32)

    loss = vat_loss(x, p, d_noise, We, be, Wc, bc)
    jax.block_until_ready(loss)
    print("KERNEL_OK")
</pallas_src>

<mosaic_0001>
module attributes {stable_mosaic.version = 11 : i64} {
  func.func @_vat_kernel(%arg0: i32, %arg1: memref<8x1024xf32, #tpu.memory_space<vmem>>, %arg2: memref<8x1024xf32, #tpu.memory_space<vmem>>, %arg3: memref<8x16xf32, #tpu.memory_space<vmem>>, %arg4: memref<1024x16xbf16, #tpu.memory_space<vmem>>, %arg5: memref<1x16xf32, #tpu.memory_space<vmem>>, %arg6: memref<8x1xf32, #tpu.memory_space<vmem>>) attributes {dimension_semantics = [#tpu.dimension_semantics<parallel>], iteration_bounds = array<i64: 1>, scalar_prefetch = 0 : i64, scratch_operands = 0 : i64, tpu.core_type = #tpu.core_type<tc>, window_params = [{transform_indices = @transform_0, window_bounds = array<i64: 8, 1024>}, {transform_indices = @transform_1, window_bounds = array<i64: 8, 1024>}, {transform_indices = @transform_2, window_bounds = array<i64: 8, 16>}, {pipeline_mode = #tpu.pipeline_mode<synchronous>, transform_indices = @transform_3, window_bounds = array<i64: 1024, 16>}, {pipeline_mode = #tpu.pipeline_mode<synchronous>, transform_indices = @transform_4, window_bounds = array<i64: 1, 16>}, {transform_indices = @transform_5, window_bounds = array<i64: 8, 1>}]} {
    %c0 = arith.constant 0 : index
    %c0_0 = arith.constant 0 : index
    %0 = vector.load %arg1[%c0, %c0_0] : memref<8x1024xf32, #tpu.memory_space<vmem>>, vector<8x1024xf32>
    %c0_1 = arith.constant 0 : index
    %c0_2 = arith.constant 0 : index
    %1 = vector.load %arg2[%c0_1, %c0_2] : memref<8x1024xf32, #tpu.memory_space<vmem>>, vector<8x1024xf32>
    %c0_3 = arith.constant 0 : index
    %c0_4 = arith.constant 0 : index
    %2 = vector.load %arg3[%c0_3, %c0_4] : memref<8x16xf32, #tpu.memory_space<vmem>>, vector<8x16xf32>
    %c0_5 = arith.constant 0 : index
    %c0_6 = arith.constant 0 : index
    %3 = vector.load %arg4[%c0_5, %c0_6] : memref<1024x16xbf16, #tpu.memory_space<vmem>>, vector<1024x16xbf16>
    %c0_7 = arith.constant 0 : index
    %c0_8 = arith.constant 0 : index
    %4 = vector.load %arg5[%c0_7, %c0_8] : memref<1x16xf32, #tpu.memory_space<vmem>>, vector<1x16xf32>
    %5 = tpu.iota {dimensions = array<i32: 0>} : vector<8x1xi32>
    %c8_i32 = arith.constant 8 : i32
    %6 = arith.muli %arg0, %c8_i32 : i32
    %7 = vector.broadcast %6 : i32 to vector<8x1xi32>
    %8 = arith.addi %5, %7 : vector<8x1xi32>
    %c2_i32 = arith.constant 2 : i32
    %9 = vector.broadcast %c2_i32 : i32 to vector<8x1xi32>
    %10 = arith.cmpi slt, %8, %9 : vector<8x1xi32>
    %11 = arith.extui %10 : vector<8x1xi1> to vector<8x1xi32>
    %12 = arith.sitofp %11 : vector<8x1xi32> to vector<8x1xf32>
    %13 = arith.mulf %1, %1 : vector<8x1024xf32>
    %cst = arith.constant dense<0.000000e+00> : vector<8xf32>
    %14 = vector.multi_reduction <add>, %13, %cst [1] : vector<8x1024xf32> to vector<8xf32>
    %15 = vector.shape_cast %14 : vector<8xf32> to vector<8x1xf32>
    %cst_9 = arith.constant 1.000000e-24 : f32
    %16 = vector.broadcast %cst_9 : f32 to vector<8x1xf32>
    %17 = arith.maximumf %15, %16 : vector<8x1xf32>
    %18 = math.rsqrt %17 : vector<8x1xf32>
    %cst_10 = arith.constant 9.99999997E-7 : f32
    %19 = vector.broadcast %cst_10 : f32 to vector<8x1xf32>
    %20 = arith.mulf %19, %18 : vector<8x1xf32>
    %21 = vector.broadcast %20 : vector<8x1xf32> to vector<8x1024xf32>
    %22 = arith.mulf %1, %21 : vector<8x1024xf32>
    %23 = arith.addf %0, %22 : vector<8x1024xf32>
    %24 = arith.truncf %23 : vector<8x1024xf32> to vector<8x1024xbf16>
    %cst_11 = arith.constant dense<0.000000e+00> : vector<8x16xf32>
    %25 = tpu.matmul %24, %3, %cst_11 {dimension_numbers = #tpu.dot_dimension_numbers<[1], [0], [0], [1], [0, 0, 1, 1], [], []>} : vector<8x1024xbf16>, vector<1024x16xbf16>, vector<8x16xf32> -> vector<8x16xf32>
    %26 = vector.broadcast %4 : vector<1x16xf32> to vector<8x16xf32>
    %27 = arith.addf %25, %26 : vector<8x16xf32>
    %cst_12 = arith.constant dense<0xFF800000> : vector<8xf32>
    %28 = vector.multi_reduction <maximumf>, %2, %cst_12 [1] : vector<8x16xf32> to vector<8xf32>
    %29 = vector.shape_cast %28 : vector<8xf32> to vector<8x1xf32>
    %30 = vector.broadcast %29 : vector<8x1xf32> to vector<8x16xf32>
    %31 = arith.subf %2, %30 : vector<8x16xf32>
    %32 = math.exp %31 : vector<8x16xf32>
    %cst_13 = arith.constant dense<0.000000e+00> : vector<8xf32>
    %33 = vector.multi_reduction <add>, %32, %cst_13 [1] : vector<8x16xf32> to vector<8xf32>
    %34 = vector.shape_cast %33 : vector<8xf32> to vector<8x1xf32>
    %35 = tpu.reciprocal %34 {approx = true} : vector<8x1xf32> -> vector<8x1xf32>
    %36 = vector.broadcast %35 : vector<8x1xf32> to vector<8x16xf32>
    %37 = arith.mulf %32, %36 : vector<8x16xf32>
    %cst_14 = arith.constant dense<0xFF800000> : vector<8xf32>
    %38 = vector.multi_reduction <maximumf>, %27, %cst_14 [1] : vector<8x16xf32> to vector<8xf32>
    %39 = vector.shape_cast %38 : vector<8xf32> to vector<8x1xf32>
    %40 = vector.broadcast %39 : vector<8x1xf32> to vector<8x16xf32>
    %41 = arith.subf %27, %40 : vector<8x16xf32>
    %42 = math.exp %41 : vector<8x16xf32>
    %cst_15 = arith.constant dense<0.000000e+00> : vector<8xf32>
    %43 = vector.multi_reduction <add>, %42, %cst_15 [1] : vector<8x16xf32> to vector<8xf32>
    %44 = vector.shape_cast %43 : vector<8xf32> to vector<8x1xf32>
    %45 = tpu.reciprocal %44 {approx = true} : vector<8x1xf32> -> vector<8x1xf32>
    %46 = vector.broadcast %45 : vector<8x1xf32> to vector<8x16xf32>
    %47 = arith.mulf %42, %46 : vector<8x16xf32>
    %48 = arith.subf %47, %37 : vector<8x16xf32>
    %49 = arith.truncf %48 : vector<8x16xf32> to vector<8x16xbf16>
    %cst_16 = arith.constant dense<0.000000e+00> : vector<8x1024xf32>
    %50 = tpu.matmul %49, %3, %cst_16 {dimension_numbers = #tpu.dot_dimension_numbers<[1], [1], [0], [0], [0, 0, 1, 0], [], []>} : vector<8x16xbf16>, vector<1024x16xbf16>, vector<8x1024xf32> -> vector<8x1024xf32>
    %51 = arith.mulf %50, %50 : vector<8x1024xf32>
    %cst_17 = arith.constant dense<0.000000e+00> : vector<8xf32>
    %52 = vector.multi_reduction <add>, %51, %cst_17 [1] : vector<8x1024xf32> to vector<8xf32>
    %53 = vector.shape_cast %52 : vector<8xf32> to vector<8x1xf32>
    %cst_18 = arith.constant 1.000000e-24 : f32
    %54 = vector.broadcast %cst_18 : f32 to vector<8x1xf32>
    %55 = arith.maximumf %53, %54 : vector<8x1xf32>
    %56 = math.rsqrt %55 : vector<8x1xf32>
    %cst_19 = arith.constant 1.225000e+01 : f32
    %57 = vector.broadcast %cst_19 : f32 to vector<8x1xf32>
    %58 = arith.mulf %57, %56 : vector<8x1xf32>
    %59 = vector.broadcast %58 : vector<8x1xf32> to vector<8x1024xf32>
    %60 = arith.mulf %50, %59 : vector<8x1024xf32>
    %61 = arith.addf %0, %60 : vector<8x1024xf32>
    %62 = arith.truncf %61 : vector<8x1024xf32> to vector<8x1024xbf16>
    %cst_20 = arith.constant dense<0.000000e+00> : vector<8x16xf32>
    %63 = tpu.matmul %62, %3, %cst_20 {dimension_numbers = #tpu.dot_dimension_numbers<[1], [0], [0], [1], [0, 0, 1, 1], [], []>} : vector<8x1024xbf16>, vector<1024x16xbf16>, vector<8x16xf32> -> vector<8x16xf32>
    %64 = vector.broadcast %4 : vector<1x16xf32> to vector<8x16xf32>
    %65 = arith.addf %63, %64 : vector<8x16xf32>
    %cst_21 = arith.constant dense<0xFF800000> : vector<8xf32>
    %66 = vector.multi_reduction <maximumf>, %65, %cst_21 [1] : vector<8x16xf32> to vector<8xf32>
    %67 = vector.shape_cast %66 : vector<8xf32> to vector<8x1xf32>
    %68 = vector.broadcast %67 : vector<8x1xf32> to vector<8x16xf32>
    %69 = arith.subf %65, %68 : vector<8x16xf32>
    %70 = math.exp %69 : vector<8x16xf32>
    %cst_22 = arith.constant dense<0.000000e+00> : vector<8xf32>
    %71 = vector.multi_reduction <add>, %70, %cst_22 [1] : vector<8x16xf32> to vector<8xf32>
    %72 = vector.shape_cast %71 : vector<8xf32> to vector<8x1xf32>
    %73 = math.log %72 : vector<8x1xf32>
    %74 = vector.broadcast %73 : vector<8x1xf32> to vector<8x16xf32>
    %75 = arith.subf %69, %74 : vector<8x16xf32>
    %76 = arith.mulf %75, %37 : vector<8x16xf32>
    %cst_23 = arith.constant dense<0.000000e+00> : vector<8xf32>
    %77 = vector.multi_reduction <add>, %76, %cst_23 [1] : vector<8x16xf32> to vector<8xf32>
    %78 = vector.shape_cast %77 : vector<8xf32> to vector<8x1xf32>
    %cst_24 = arith.constant 0.000000e+00 : f32
    %79 = vector.broadcast %cst_24 : f32 to vector<8x1xf32>
    %80 = arith.subf %79, %78 : vector<8x1xf32>
    %81 = arith.mulf %80, %12 : vector<8x1xf32>
    %c0_25 = arith.constant 0 : index
    %c0_26 = arith.constant 0 : index
    %82 = vector.load %arg6[%c0_25, %c0_26] : memref<8x1xf32, #tpu.memory_space<vmem>>, vector<8x1xf32>
    tpu.vector_store %arg6[%c0_25, %c0_26], %81 {strides = array<i32>} : memref<8x1xf32, #tpu.memory_space<vmem>>, vector<8x1xf32>,
    return
  }
  func.func @transform_0(%arg0: i32) -> (i32, i32) {
    %c0_i32 = arith.constant 0 : i32
    %c0_i32_0 = arith.constant 0 : i32
    return %arg0, %c0_i32 : i32, i32
  }
  func.func @transform_1(%arg0: i32) -> (i32, i32) {
    %c0_i32 = arith.constant 0 : i32
    %c0_i32_0 = arith.constant 0 : i32
    return %arg0, %c0_i32 : i32, i32
  }
  func.func @transform_2(%arg0: i32) -> (i32, i32) {
    %c0_i32 = arith.constant 0 : i32
    %c0_i32_0 = arith.constant 0 : i32
    return %arg0, %c0_i32 : i32, i32
  }
  func.func @transform_3(%arg0: i32) -> (i32, i32) {
    %c0_i32 = arith.constant 0 : i32
    %c0_i32_0 = arith.constant 0 : i32
    %c0_i32_1 = arith.constant 0 : i32
    return %c0_i32, %c0_i32_0 : i32, i32
  }
  func.func @transform_4(%arg0: i32) -> (i32, i32) {
    %c0_i32 = arith.constant 0 : i32
    %c0_i32_0 = arith.constant 0 : i32
    %c0_i32_1 = arith.constant 0 : i32
    return %c0_i32, %c0_i32_0 : i32, i32
  }
  func.func @transform_5(%arg0: i32) -> (i32, i32) {
    %c0_i32 = arith.constant 0 : i32
    %c0_i32_0 = arith.constant 0 : i32
    return %arg0, %c0_i32 : i32, i32
  }
}

</mosaic_0001>

<llo_original>
// kernel: tpu_custom_call.1
$region0: #{tpu_custom_call.1}
  #allocation0 [shape = 'u32[]', space=smem, size = 0x4, offset = 0x4, fixed_abs, tag = 'smem constant byte address 0x4 - core index']
  #allocation1 [shape = 'u32[144,128]{1,0:T(1,128)}', space=vmem, size = 0x12000, scoped, tag = 'internal scratch']
  %s0 = inlined_call_operand.vmem [shape: f32[8,1024], index: 0, kind: input, shape index: {}]
  %s1 = inlined_call_operand.vmem [shape: f32[8,1024], index: 1, kind: input, shape index: {}]
  %s2 = inlined_call_operand.vmem [shape: f32[8,16], index: 2, kind: input, shape index: {}]
  %s3 = inlined_call_operand.vmem [shape: bf16[1024,16], index: 3, kind: input, shape index: {}]
  %s4 = inlined_call_operand.vmem [shape: f32[1,16], index: 4, kind: input, shape index: {}]
  %s5 = inlined_call_operand.vmem [shape: f32[8,1], index: 5, kind: output, shape index: {}]
  %s6 = sld [smem:[#allocation0]]
  $region30: #{tpu_custom_call.1} parent=0
    _
  %s8 = ssub.s32 1, %s6
  %s9 = scalar_select 0, %s8, %s6
  // Predicated region
  $region2: #{tpu_custom_call.1} parent=0 // pred_check
    _
  $region3: #{tpu_custom_call.1} parent=0 // pred_check_branch
    %11 = sbr.rel (0) target = $region5
  $region4: #{tpu_custom_call.1} parent=0 // pred_region
    _
  $region5: #{tpu_custom_call.1} parent=0 // pred_fallthru
    _
  // Predicated region
  $region6: #{tpu_custom_call.1} parent=0 // pred_check
    _
  $region7: #{tpu_custom_call.1} parent=0 // pred_check_branch
    %13 = sbr.rel (0) target = $region9
  $region8: #{tpu_custom_call.1} parent=0 // pred_region
    _
  $region9: #{tpu_custom_call.1} parent=0 // pred_fallthru
    _
  // Predicated region
  $region10: #{tpu_custom_call.1} parent=0 // pred_check
    _
  $region11: #{tpu_custom_call.1} parent=0 // pred_check_branch
    %15 = sbr.rel (0) target = $region13
  $region12: #{tpu_custom_call.1} parent=0 // pred_region
    _
  $region13: #{tpu_custom_call.1} parent=0 // pred_fallthru
    _
  // Predicated region
  $region14: #{tpu_custom_call.1} parent=0 // pred_check
    _
  $region15: #{tpu_custom_call.1} parent=0 // pred_check_branch
    %17 = sbr.rel (0) target = $region17
  $region16: #{tpu_custom_call.1} parent=0 // pred_region
    _
  $region17: #{tpu_custom_call.1} parent=0 // pred_fallthru
    _
  // Predicated region
  $region18: #{tpu_custom_call.1} parent=0 // pred_check
    _
  $region19: #{tpu_custom_call.1} parent=0 // pred_check_branch
    %19 = sbr.rel (0) target = $region21
  $region20: #{tpu_custom_call.1} parent=0 // pred_region
    _
  $region21: #{tpu_custom_call.1} parent=0 // pred_fallthru
    _
  %v21 = vld [vmem:[%s0] sm:$0xff]
  %v22 = vld [vmem:[%s0 + $0x8] sm:$0xff]
  %v23 = vld [vmem:[%s0 + $0x10] sm:$0xff]
  %v24 = vld [vmem:[%s0 + $0x18] sm:$0xff]
  %v25 = vld [vmem:[%s0 + $0x20] sm:$0xff]
  %v26 = vld [vmem:[%s0 + $0x28] sm:$0xff]
  %v27 = vld [vmem:[%s0 + $0x30] sm:$0xff]
  %v28 = vld [vmem:[%s0 + $0x38] sm:$0xff]
  %v29 = vld [vmem:[%s1] sm:$0xff]
  %v30 = vld [vmem:[%s1 + $0x8] sm:$0xff]
  %v31 = vld [vmem:[%s1 + $0x10] sm:$0xff]
  %v32 = vld [vmem:[%s1 + $0x18] sm:$0xff]
  %v33 = vld [vmem:[%s1 + $0x20] sm:$0xff]
  %v34 = vld [vmem:[%s1 + $0x28] sm:$0xff]
  %v35 = vld [vmem:[%s1 + $0x30] sm:$0xff]
  %v36 = vld [vmem:[%s1 + $0x38] sm:$0xff]
  %v37 = vld [vmem:[%s2] sm:$0xff]
  %v38 = vld [vmem:[%s3] sm:$0xf]
  %v39 = vld [vmem:[%s3 + $0x4] sm:$0xf]
  %v40 = vld [vmem:[%s3 + $0x8] sm:$0xf]
  %v41 = vld [vmem:[%s3 + $0xc] sm:$0xf]
  %v42 = vld [vmem:[%s3 + $0x10] sm:$0xf]
  %v43 = vld [vmem:[%s3 + $0x14] sm:$0xf]
  %v44 = vld [vmem:[%s3 + $0x18] sm:$0xf]
  %v45 = vld [vmem:[%s3 + $0x1c] sm:$0xf]
  %v46 = vld [vmem:[%s3 + $0x20] sm:$0xf]
  %v47 = vld [vmem:[%s3 + $0x24] sm:$0xf]
  %v48 = vld [vmem:[%s3 + $0x28] sm:$0xf]
  %v49 = vld [vmem:[%s3 + $0x2c] sm:$0xf]
  %v50 = vld [vmem:[%s3 + $0x30] sm:$0xf]
  %v51 = vld [vmem:[%s3 + $0x34] sm:$0xf]
  %v52 = vld [vmem:[%s3 + $0x38] sm:$0xf]
  %v53 = vld [vmem:[%s3 + $0x3c] sm:$0xf]
  %v54 = vld [vmem:[%s3 + $0x40] sm:$0xf]
  %v55 = vld [vmem:[%s3 + $0x44] sm:$0xf]
  %v56 = vld [vmem:[%s3 + $0x48] sm:$0xf]
  %v57 = vld [vmem:[%s3 + $0x4c] sm:$0xf]
  %v58 = vld [vmem:[%s3 + $0x50] sm:$0xf]
  %v59 = vld [vmem:[%s3 + $0x54] sm:$0xf]
  %v60 = vld [vmem:[%s3 + $0x58] sm:$0xf]
  %v61 = vld [vmem:[%s3 + $0x5c] sm:$0xf]
  %v62 = vld [vmem:[%s3 + $0x60] sm:$0xf]
  %v63 = vld [vmem:[%s3 + $0x64] sm:$0xf]
  %v64 = vld [vmem:[%s3 + $0x68] sm:$0xf]
  %v65 = vld [vmem:[%s3 + $0x6c] sm:$0xf]
  %v66 = vld [vmem:[%s3 + $0x70] sm:$0xf]
  %v67 = vld [vmem:[%s3 + $0x74] sm:$0xf]
  %v68 = vld [vmem:[%s3 + $0x78] sm:$0xf]
  %v69 = vld [vmem:[%s3 + $0x7c] sm:$0xf]
  %v70 = vld [vmem:[%s3 + $0x80] sm:$0xf]
  %v71 = vld [vmem:[%s3 + $0x84] sm:$0xf]
  %v72 = vld [vmem:[%s3 + $0x88] sm:$0xf]
  %v73 = vld [vmem:[%s3 + $0x8c] sm:$0xf]
  %v74 = vld [vmem:[%s3 + $0x90] sm:$0xf]
  %v75 = vld [vmem:[%s3 + $0x94] sm:$0xf]
  %v76 = vld [vmem:[%s3 + $0x98] sm:$0xf]
  %v77 = vld [vmem:[%s3 + $0x9c] sm:$0xf]
  %v78 = vld [vmem:[%s3 + $0xa0] sm:$0xf]
  %v79 = vld [vmem:[%s3 + $0xa4] sm:$0xf]
  %v80 = vld [vmem:[%s3 + $0xa8] sm:$0xf]
  %v81 = vld [vmem:[%s3 + $0xac] sm:$0xf]
  %v82 = vld [vmem:[%s3 + $0xb0] sm:$0xf]
  %v83 = vld [vmem:[%s3 + $0xb4] sm:$0xf]
  %v84 = vld [vmem:[%s3 + $0xb8] sm:$0xf]
  %v85 = vld [vmem:[%s3 + $0xbc] sm:$0xf]
  %v86 = vld [vmem:[%s3 + $0xc0] sm:$0xf]
  %v87 = vld [vmem:[%s3 + $0xc4] sm:$0xf]
  %v88 = vld [vmem:[%s3 + $0xc8] sm:$0xf]
  %v89 = vld [vmem:[%s3 + $0xcc] sm:$0xf]
  %v90 = vld [vmem:[%s3 + $0xd0] sm:$0xf]
  %v91 = vld [vmem:[%s3 + $0xd4] sm:$0xf]
  %v92 = vld [vmem:[%s3 + $0xd8] sm:$0xf]
  %v93 = vld [vmem:[%s3 + $0xdc] sm:$0xf]
  %v94 = vld [vmem:[%s3 + $0xe0] sm:$0xf]
  %v95 = vld [vmem:[%s3 + $0xe4] sm:$0xf]
  %v96 = vld [vmem:[%s3 + $0xe8] sm:$0xf]
  %v97 = vld [vmem:[%s3 + $0xec] sm:$0xf]
  %v98 = vld [vmem:[%s3 + $0xf0] sm:$0xf]
  %v99 = vld [vmem:[%s3 + $0xf4] sm:$0xf]
  %v100 = vld [vmem:[%s3 + $0xf8] sm:$0xf]
  %v101 = vld [vmem:[%s3 + $0xfc] sm:$0xf]
  %v102 = vld [vmem:[%s3 + $0x100] sm:$0xf]
  %v103 = vld [vmem:[%s3 + $0x104] sm:$0xf]
  %v104 = vld [vmem:[%s3 + $0x108] sm:$0xf]
  %v105 = vld [vmem:[%s3 + $0x10c] sm:$0xf]
  %v106 = vld [vmem:[%s3 + $0x110] sm:$0xf]
  %v107 = vld [vmem:[%s3 + $0x114] sm:$0xf]
  %v108 = vld [vmem:[%s3 + $0x118] sm:$0xf]
  %v109 = vld [vmem:[%s3 + $0x11c] sm:$0xf]
  %v110 = vld [vmem:[%s3 + $0x120] sm:$0xf]
  %v111 = vld [vmem:[%s3 + $0x124] sm:$0xf]
  %v112 = vld [vmem:[%s3 + $0x128] sm:$0xf]
  %v113 = vld [vmem:[%s3 + $0x12c] sm:$0xf]
  %v114 = vld [vmem:[%s3 + $0x130] sm:$0xf]
  %v115 = vld [vmem:[%s3 + $0x134] sm:$0xf]
  %v116 = vld [vmem:[%s3 + $0x138] sm:$0xf]
  %v117 = vld [vmem:[%s3 + $0x13c] sm:$0xf]
  %v118 = vld [vmem:[%s3 + $0x140] sm:$0xf]
  %v119 = vld [vmem:[%s3 + $0x144] sm:$0xf]
  %v120 = vld [vmem:[%s3 + $0x148] sm:$0xf]
  %v121 = vld [vmem:[%s3 + $0x14c] sm:$0xf]
  %v122 = vld [vmem:[%s3 + $0x150] sm:$0xf]
  %v123 = vld [vmem:[%s3 + $0x154] sm:$0xf]
  %v124 = vld [vmem:[%s3 + $0x158] sm:$0xf]
  %v125 = vld [vmem:[%s3 + $0x15c] sm:$0xf]
  %v126 = vld [vmem:[%s3 + $0x160] sm:$0xf]
  %v127 = vld [vmem:[%s3 + $0x164] sm:$0xf]
  %v128 = vld [vmem:[%s3 + $0x168] sm:$0xf]
  %v129 = vld [vmem:[%s3 + $0x16c] sm:$0xf]
  %v130 = vld [vmem:[%s3 + $0x170] sm:$0xf]
  %v131 = vld [vmem:[%s3 + $0x174] sm:$0xf]
  %v132 = vld [vmem:[%s3 + $0x178] sm:$0xf]
  %v133 = vld [vmem:[%s3 + $0x17c] sm:$0xf]
  %v134 = vld [vmem:[%s3 + $0x180] sm:$0xf]
  %v135 = vld [vmem:[%s3 + $0x184] sm:$0xf]
  %v136 = vld [vmem:[%s3 + $0x188] sm:$0xf]
  %v137 = vld [vmem:[%s3 + $0x18c] sm:$0xf]
  %v138 = vld [vmem:[%s3 + $0x190] sm:$0xf]
  %v139 = vld [vmem:[%s3 + $0x194] sm:$0xf]
  %v140 = vld [vmem:[%s3 + $0x198] sm:$0xf]
  %v141 = vld [vmem:[%s3 + $0x19c] sm:$0xf]
  %v142 = vld [vmem:[%s3 + $0x1a0] sm:$0xf]
  %v143 = vld [vmem:[%s3 + $0x1a4] sm:$0xf]
  %v144 = vld [vmem:[%s3 + $0x1a8] sm:$0xf]
  %v145 = vld [vmem:[%s3 + $0x1ac] sm:$0xf]
  %v146 = vld [vmem:[%s3 + $0x1b0] sm:$0xf]
  %v147 = vld [vmem:[%s3 + $0x1b4] sm:$0xf]
  %v148 = vld [vmem:[%s3 + $0x1b8] sm:$0xf]
  %v149 = vld [vmem:[%s3 + $0x1bc] sm:$0xf]
  %v150 = vld [vmem:[%s3 + $0x1c0] sm:$0xf]
  %v151 = vld [vmem:[%s3 + $0x1c4] sm:$0xf]
  %v152 = vld [vmem:[%s3 + $0x1c8] sm:$0xf]
  %v153 = vld [vmem:[%s3 + $0x1cc] sm:$0xf]
  %v154 = vld [vmem:[%s3 + $0x1d0] sm:$0xf]
  %v155 = vld [vmem:[%s3 + $0x1d4] sm:$0xf]
  %v156 = vld [vmem:[%s3 + $0x1d8] sm:$0xf]
  %v157 = vld [vmem:[%s3 + $0x1dc] sm:$0xf]
  %v158 = vld [vmem:[%s3 + $0x1e0] sm:$0xf]
  %v159 = vld [vmem:[%s3 + $0x1e4] sm:$0xf]
  %v160 = vld [vmem:[%s3 + $0x1e8] sm:$0xf]
  %v161 = vld [vmem:[%s3 + $0x1ec] sm:$0xf]
  %v162 = vld [vmem:[%s3 + $0x1f0] sm:$0xf]
  %v163 = vld [vmem:[%s3 + $0x1f4] sm:$0xf]
  %v164 = vld [vmem:[%s3 + $0x1f8] sm:$0xf]
  %v165 = vld [vmem:[%s3 + $0x1fc] sm:$0xf]
  %v166 = vld [vmem:[%s4] sm:$0x1]
  %v167 = vlaneseq
  %v168 = vshrl.u32 %v167, 7
  %s169 = smul.u32 0, 8
  %v170 = vstv %s169
  %v171 = vadd.s32 %v168, %v170
  %vm172 = vcmp.lt.s32.totalorder %v171, 2
  %v173 = vsel %vm172, 1, 0
  %v174 = vcvt.s32.f32 %v173
  %v175 = vmul.f32 %v29, %v29
  %v176 = vmul.f32 %v30, %v30
  %v177 = vmul.f32 %v31, %v31
  %v178 = vmul.f32 %v32, %v32
  %v179 = vmul.f32 %v33, %v33
  %v180 = vmul.f32 %v34, %v34
  %v181 = vmul.f32 %v35, %v35
  %v182 = vmul.f32 %v36, %v36
  %v183 = vadd.f32 %v175, %v176
  %v184 = vadd.f32 %v183, %v177
  %v185 = vadd.f32 %v184, %v178
  %v186 = vadd.f32 %v185, %v179
  %v187 = vadd.f32 %v186, %v180
  %v188 = vadd.f32 %v187, %v181
  %v189 = vadd.f32 %v188, %v182
  %190 = vadd.xlane.f32.xlu0 %v189
  %v191 = vpop.xlane.xlu0 %190
  %v192 = vmax.f32 %v191, 1e-24
  %v193 = vrsqrt.pop %v192
  %v194 = vmul.f32 %v193, 1e-06
  %v195 = vmul.f32 %v29, %v194
  %v196 = vmul.f32 %v30, %v194
  %v197 = vmul.f32 %v31, %v194
  %v198 = vmul.f32 %v32, %v194
  %v199 = vmul.f32 %v33, %v194
  %v200 = vmul.f32 %v34, %v194
  %v201 = vmul.f32 %v35, %v194
  %v202 = vmul.f32 %v36, %v194
  %v203 = vadd.f32 %v21, %v195
  %v204 = vadd.f32 %v22, %v196
  %v205 = vadd.f32 %v23, %v197
  %v206 = vadd.f32 %v24, %v198
  %v207 = vadd.f32 %v25, %v199
  %v208 = vadd.f32 %v26, %v200
  %v209 = vadd.f32 %v27, %v201
  %v210 = vadd.f32 %v28, %v202
  %v211 = vpack.c.bf16 %v203, %v203
  %v212 = vpack.c.bf16 %v204, %v204
  %v213 = vpack.c.bf16 %v205, %v205
  %v214 = vpack.c.bf16 %v206, %v206
  %v215 = vpack.c.bf16 %v207, %v207
  %v216 = vpack.c.bf16 %v208, %v208
  %v217 = vpack.c.bf16 %v209, %v209
  %v218 = vpack.c.bf16 %v210, %v210
  %v220 = vlaneseq
  %v221 = vshrl.u32 %v220, 7
  %v222 = vsub.s32 0, %v221
  %v223 = vrot.slane %v166, %v222
  %v353 = vunpack.c.l.b16 %v38
  %v354 = vunpack.c.l.b16 %v39
  %v355 = vunpack.c.l.b16 %v40
  %v356 = vunpack.c.l.b16 %v41
  %v357 = vunpack.c.l.b16 %v42
  %v358 = vunpack.c.l.b16 %v43
  %v359 = vunpack.c.l.b16 %v44
  %v360 = vunpack.c.l.b16 %v45
  %v361 = vunpack.c.l.b16 %v46
  %v362 = vunpack.c.l.b16 %v47
  %v363 = vunpack.c.l.b16 %v48
  %v364 = vunpack.c.l.b16 %v49
  %v365 = vunpack.c.l.b16 %v50
  %v366 = vunpack.c.l.b16 %v51
  %v367 = vunpack.c.l.b16 %v52
  %v368 = vunpack.c.l.b16 %v53
  %v369 = vunpack.c.l.b16 %v54
  %v370 = vunpack.c.l.b16 %v55
  %v371 = vunpack.c.l.b16 %v56
  %v372 = vunpack.c.l.b16 %v57
  %v373 = vunpack.c.l.b16 %v58
  %v374 = vunpack.c.l.b16 %v59
  %v375 = vunpack.c.l.b16 %v60
  %v376 = vunpack.c.l.b16 %v61
  %v377 = vunpack.c.l.b16 %v62
  %v378 = vunpack.c.l.b16 %v63
  %v379 = vunpack.c.l.b16 %v64
  %v380 = vunpack.c.l.b16 %v65
  %v381 = vunpack.c.l.b16 %v66
  %v382 = vunpack.c.l.b16 %v67
  %v383 = vunpack.c.l.b16 %v68
  %v384 = vunpack.c.l.b16 %v69
  %v385 = vunpack.c.l.b16 %v70
  %v386 = vunpack.c.l.b16 %v71
  %v387 = vunpack.c.l.b16 %v72
  %v388 = vunpack.c.l.b16 %v73
  %v389 = vunpack.c.l.b16 %v74
  %v390 = vunpack.c.l.b16 %v75
  %v391 = vunpack.c.l.b16 %v76
  %v392 = vunpack.c.l.b16 %v77
  %v393 = vunpack.c.l.b16 %v78
  %v394 = vunpack.c.l.b16 %v79
  %v395 = vunpack.c.l.b16 %v80
  %v396 = vunpack.c.l.b16 %v81
  %v397 = vunpack.c.l.b16 %v82
  %v398 = vunpack.c.l.b16 %v83
  %v399 = vunpack.c.l.b16 %v84
  %v400 = vunpack.c.l.b16 %v85
  %v401 = vunpack.c.l.b16 %v86
  %v402 = vunpack.c.l.b16 %v87
  %v403 = vunpack.c.l.b16 %v88
  %v404 = vunpack.c.l.b16 %v89
  %v405 = vunpack.c.l.b16 %v90
  %v406 = vunpack.c.l.b16 %v91
  %v407 = vunpack.c.l.b16 %v92
  %v408 = vunpack.c.l.b16 %v93
  %v409 = vunpack.c.l.b16 %v94
  %v410 = vunpack.c.l.b16 %v95
  %v411 = vunpack.c.l.b16 %v96
  %v412 = vunpack.c.l.b16 %v97
  %v413 = vunpack.c.l.b16 %v98
  %v414 = vunpack.c.l.b16 %v99
  %v415 = vunpack.c.l.b16 %v100
  %v416 = vunpack.c.l.b16 %v101
  %v417 = vunpack.c.l.b16 %v102
  %v418 = vunpack.c.l.b16 %v103
  %v419 = vunpack.c.l.b16 %v104
  %v420 = vunpack.c.l.b16 %v105
  %v421 = vunpack.c.l.b16 %v106
  %v422 = vunpack.c.l.b16 %v107
  %v423 = vunpack.c.l.b16 %v108
  %v424 = vunpack.c.l.b16 %v109
  %v425 = vunpack.c.l.b16 %v110
  %v426 = vunpack.c.l.b16 %v111
  %v427 = vunpack.c.l.b16 %v112
  %v428 = vunpack.c.l.b16 %v113
  %v429 = vunpack.c.l.b16 %v114
  %v430 = vunpack.c.l.b16 %v115
  %v431 = vunpack.c.l.b16 %v116
  %v432 = vunpack.c.l.b16 %v117
  %v433 = vunpack.c.l.b16 %v118
  %v434 = vunpack.c.l.b16 %v119
  %v435 = vunpack.c.l.b16 %v120
  %v436 = vunpack.c.l.b16 %v121
  %v437 = vunpack.c.l.b16 %v122
  %v438 = vunpack.c.l.b16 %v123
  %v439 = vunpack.c.l.b16 %v124
  %v440 = vunpack.c.l.b16 %v125
  %v441 = vunpack.c.l.b16 %v126
  %v442 = vunpack.c.l.b16 %v127
  %v443 = vunpack.c.l.b16 %v128
  %v444 = vunpack.c.l.b16 %v129
  %v445 = vunpack.c.l.b16 %v130
  %v446 = vunpack.c.l.b16 %v131
  %v447 = vunpack.c.l.b16 %v132
  %v448 = vunpack.c.l.b16 %v133
  %v449 = vunpack.c.l.b16 %v134
  %v450 = vunpack.c.l.b16 %v135
  %v451 = vunpack.c.l.b16 %v136
  %v452 = vunpack.c.l.b16 %v137
  %v453 = vunpack.c.l.b16 %v138
  %v454 = vunpack.c.l.b16 %v139
  %v455 = vunpack.c.l.b16 %v140
  %v456 = vunpack.c.l.b16 %v141
  %v457 = vunpack.c.l.b16 %v142
  %v458 = vunpack.c.l.b16 %v143
  %v459 = vunpack.c.l.b16 %v144
  %v460 = vunpack.c.l.b16 %v145
  %v461 = vunpack.c.l.b16 %v146
  %v462 = vunpack.c.l.b16 %v147
  %v463 = vunpack.c.l.b16 %v148
  %v464 = vunpack.c.l.b16 %v149
  %v465 = vunpack.c.l.b16 %v150
  %v466 = vunpack.c.l.b16 %v151
  %v467 = vunpack.c.l.b16 %v152
  %v468 = vunpack.c.l.b16 %v153
  %v469 = vunpack.c.l.b16 %v154
  %v470 = vunpack.c.l.b16 %v155
  %v471 = vunpack.c.l.b16 %v156
  %v472 = vunpack.c.l.b16 %v157
  %v473 = vunpack.c.l.b16 %v158
  %v474 = vunpack.c.l.b16 %v159
  %v475 = vunpack.c.l.b16 %v160
  %v476 = vunpack.c.l.b16 %v161
  %v477 = vunpack.c.l.b16 %v162
  %v478 = vunpack.c.l.b16 %v163
  %v479 = vunpack.c.l.b16 %v164
  %v480 = vunpack.c.l.b16 %v165
  %v481 = vpack.c.b16 %v354, %v353
  %v482 = vpack.c.b16 %v356, %v355
  %v483 = vpack.c.b16 %v358, %v357
  %v484 = vpack.c.b16 %v360, %v359
  %v485 = vpack.c.b16 %v362, %v361
  %v486 = vpack.c.b16 %v364, %v363
  %v487 = vpack.c.b16 %v366, %v365
  %v488 = vpack.c.b16 %v368, %v367
  %v489 = vpack.c.b16 %v370, %v369
  %v490 = vpack.c.b16 %v372, %v371
  %v491 = vpack.c.b16 %v374, %v373
  %v492 = vpack.c.b16 %v376, %v375
  %v493 = vpack.c.b16 %v378, %v377
  %v494 = vpack.c.b16 %v380, %v379
  %v495 = vpack.c.b16 %v382, %v381
  %v496 = vpack.c.b16 %v384, %v383
  %v497 = vpack.c.b16 %v386, %v385
  %v498 = vpack.c.b16 %v388, %v387
  %v499 = vpack.c.b16 %v390, %v389
  %v500 = vpack.c.b16 %v392, %v391
  %v501 = vpack.c.b16 %v394, %v393
  %v502 = vpack.c.b16 %v396, %v395
  %v503 = vpack.c.b16 %v398, %v397
  %v504 = vpack.c.b16 %v400, %v399
  %v505 = vpack.c.b16 %v402, %v401
  %v506 = vpack.c.b16 %v404, %v403
  %v507 = vpack.c.b16 %v406, %v405
  %v508 = vpack.c.b16 %v408, %v407
  %v509 = vpack.c.b16 %v410, %v409
  %v510 = vpack.c.b16 %v412, %v411
  %v511 = vpack.c.b16 %v414, %v413
  %v512 = vpack.c.b16 %v416, %v415
  %v513 = vpack.c.b16 %v418, %v417
  %v514 = vpack.c.b16 %v420, %v419
  %v515 = vpack.c.b16 %v422, %v421
  %v516 = vpack.c.b16 %v424, %v423
  %v517 = vpack.c.b16 %v426, %v425
  %v518 = vpack.c.b16 %v428, %v427
  %v519 = vpack.c.b16 %v430, %v429
  %v520 = vpack.c.b16 %v432, %v431
  %v521 = vpack.c.b16 %v434, %v433
  %v522 = vpack.c.b16 %v436, %v435
  %v523 = vpack.c.b16 %v438, %v437
  %v524 = vpack.c.b16 %v440, %v439
  %v525 = vpack.c.b16 %v442, %v441
  %v526 = vpack.c.b16 %v444, %v443
  %v527 = vpack.c.b16 %v446, %v445
  %v528 = vpack.c.b16 %v448, %v447
  %v529 = vpack.c.b16 %v450, %v449
  %v530 = vpack.c.b16 %v452, %v451
  %v531 = vpack.c.b16 %v454, %v453
  %v532 = vpack.c.b16 %v456, %v455
  %v533 = vpack.c.b16 %v458, %v457
  %v534 = vpack.c.b16 %v460, %v459
  %v535 = vpack.c.b16 %v462, %v461
  %v536 = vpack.c.b16 %v464, %v463
  %v537 = vpack.c.b16 %v466, %v465
  %v538 = vpack.c.b16 %v468, %v467
  %v539 = vpack.c.b16 %v470, %v469
  %v540 = vpack.c.b16 %v472, %v471
  %v541 = vpack.c.b16 %v474, %v473
  %v542 = vpack.c.b16 %v476, %v475
  %v543 = vpack.c.b16 %v478, %v477
  %v544 = vpack.c.b16 %v480, %v479
  %609 = vmatprep.subr.bf16.mxu0 0
  %610 = vmatpush1.bf16.msra.mxu0 %v481
  %611 = vmatprep.subr.bf16.mxu0 0
  %612 = vmatpush1.bf16.msra.mxu0 %v482
  %613 = vmatprep.subr.bf16.mxu0 0
  %614 = vmatpush1.bf16.msra.mxu0 %v483
  %615 = vmatprep.subr.bf16.mxu0 0
  %616 = vmatpush1.bf16.msra.mxu0 %v484
  %617 = vmatprep.subr.bf16.mxu0 0
  %618 = vmatpush1.bf16.msra.mxu0 %v485
  %619 = vmatprep.subr.bf16.mxu0 0
  %620 = vmatpush1.bf16.msra.mxu0 %v486
  %621 = vmatprep.subr.bf16.mxu0 0
  %622 = vmatpush1.bf16.msra.mxu0 %v487
  %623 = vmatprep.subr.bf16.mxu0 0
  %624 = vmatpush1.bf16.msra.mxu0 %v488
  %625 = vmatprep.subr.bf16.mxu0 0
  %626 = vmatpush1.bf16.msra.mxu0 %v489
  %627 = vmatprep.subr.bf16.mxu0 0
  %628 = vmatpush1.bf16.msra.mxu0 %v490
  %629 = vmatprep.subr.bf16.mxu0 0
  %630 = vmatpush1.bf16.msra.mxu0 %v491
  %631 = vmatprep.subr.bf16.mxu0 0
  %632 = vmatpush1.bf16.msra.mxu0 %v492
  %633 = vmatprep.subr.bf16.mxu0 0
  %634 = vmatpush1.bf16.msra.mxu0 %v493
  %635 = vmatprep.subr.bf16.mxu0 0
  %636 = vmatpush1.bf16.msra.mxu0 %v494
  %637 = vmatprep.subr.bf16.mxu0 0
  %638 = vmatpush1.bf16.msra.mxu0 %v495
  %639 = vmatprep.subr.bf16.mxu0 0
  %640 = vmatpush1.bf16.msra.mxu0 %v496
  %641 = vmatprep.mubr.bf16.mxu0 %v212
  %642 = vmatmul.mubr.bf16.gmra.mrb[0].mxu0 %v211
  %v643 = vpop.f32.mrb[0].mxu0
  %v644 = vadd.f32 %v223, %v643
  %v645 = vpop.f32.mrb[0].mxu0
  %v646 = vpop.f32.mrb[0].mxu0
  %v647 = vpop.f32.mrb[0].mxu0
  %648 = vdwg.mxu0
  %649 = vmatprep.subr.bf16.mxu0 0
  %650 = vmatpush1.bf16.msra.mxu0 %v497
  %651 = vmatprep.subr.bf16.mxu0 0
  %652 = vmatpush1.bf16.msra.mxu0 %v498
  %653 = vmatprep.subr.bf16.mxu0 0
  %654 = vmatpush1.bf16.msra.mxu0 %v499
  %655 = vmatprep.subr.bf16.mxu0 0
  %656 = vmatpush1.bf16.msra.mxu0 %v500
  %657 = vmatprep.subr.bf16.mxu0 0
  %658 = vmatpush1.bf16.msra.mxu0 %v501
  %659 = vmatprep.subr.bf16.mxu0 0
  %660 = vmatpush1.bf16.msra.mxu0 %v502
  %661 = vmatprep.subr.bf16.mxu0 0
  %662 = vmatpush1.bf16.msra.mxu0 %v503
  %663 = vmatprep.subr.bf16.mxu0 0
  %664 = vmatpush1.bf16.msra.mxu0 %v504
  %665 = vmatprep.subr.bf16.mxu0 0
  %666 = vmatpush1.bf16.msra.mxu0 %v505
  %667 = vmatprep.subr.bf16.mxu0 0
  %668 = vmatpush1.bf16.msra.mxu0 %v506
  %669 = vmatprep.subr.bf16.mxu0 0
  %670 = vmatpush1.bf16.msra.mxu0 %v507
  %671 = vmatprep.subr.bf16.mxu0 0
  %672 = vmatpush1.bf16.msra.mxu0 %v508
  %673 = vmatprep.subr.bf16.mxu0 0
  %674 = vmatpush1.bf16.msra.mxu0 %v509
  %675 = vmatprep.subr.bf16.mxu0 0
  %676 = vmatpush1.bf16.msra.mxu0 %v510
  %677 = vmatprep.subr.bf16.mxu0 0
  %678 = vmatpush1.bf16.msra.mxu0 %v511
  %679 = vmatprep.subr.bf16.mxu0 0
  %680 = vmatpush1.bf16.msra.mxu0 %v512
  %681 = vmatprep.mubr.bf16.mxu0 %v214
  %682 = vmatmul.mubr.bf16.gmra.mrb[0].mxu0 %v213
  %v683 = vpop.f32.mrb[0].mxu0
  %v684 = vadd.f32 %v644, %v683
  %v685 = vpop.f32.mrb[0].mxu0
  %v686 = vpop.f32.mrb[0].mxu0
  %v687 = vpop.f32.mrb[0].mxu0
  %688 = vdwg.mxu0
  %689 = vmatprep.subr.bf16.mxu0 0
  %690 = vmatpush1.bf16.msra.mxu0 %v513
  %691 = vmatprep.subr.bf16.mxu0 0
  %692 = vmatpush1.bf16.msra.mxu0 %v514
  %693 = vmatprep.subr.bf16.mxu0 0
  %694 = vmatpush1.bf16.msra.mxu0 %v515
  %695 = vmatprep.subr.bf16.mxu0 0
  %696 = vmatpush1.bf16.msra.mxu0 %v516
  %697 = vmatprep.subr.bf16.mxu0 0
  %698 = vmatpush1.bf16.msra.mxu0 %v517
  %699 = vmatprep.subr.bf16.mxu0 0
  %700 = vmatpush1.bf16.msra.mxu0 %v518
  %701 = vmatprep.subr.bf16.mxu0 0
  %702 = vmatpush1.bf16.msra.mxu0 %v519
  %703 = vmatprep.subr.bf16.mxu0 0
  %704 = vmatpush1.bf16.msra.mxu0 %v520
  %705 = vmatprep.subr.bf16.mxu0 0
  %706 = vmatpush1.bf16.msra.mxu0 %v521
  %707 = vmatprep.subr.bf16.mxu0 0
  %708 = vmatpush1.bf16.msra.mxu0 %v522
  %709 = vmatprep.subr.bf16.mxu0 0
  %710 = vmatpush1.bf16.msra.mxu0 %v523
  %711 = vmatprep.subr.bf16.mxu0 0
  %712 = vmatpush1.bf16.msra.mxu0 %v524
  %713 = vmatprep.subr.bf16.mxu0 0
  %714 = vmatpush1.bf16.msra.mxu0 %v525
  %715 = vmatprep.subr.bf16.mxu0 0
  %716 = vmatpush1.bf16.msra.mxu0 %v526
  %717 = vmatprep.subr.bf16.mxu0 0
  %718 = vmatpush1.bf16.msra.mxu0 %v527
  %719 = vmatprep.subr.bf16.mxu0 0
  %720 = vmatpush1.bf16.msra.mxu0 %v528
  %721 = vmatprep.mubr.bf16.mxu0 %v216
  %722 = vmatmul.mubr.bf16.gmra.mrb[0].mxu0 %v215
  %v723 = vpop.f32.mrb[0].mxu0
  %v724 = vadd.f32 %v684, %v723
  %v725 = vpop.f32.mrb[0].mxu0
  %v726 = vpop.f32.mrb[0].mxu0
  %v727 = vpop.f32.mrb[0].mxu0
  %728 = vdwg.mxu0
  %729 = vmatprep.subr.bf16.mxu0 0
  %730 = vmatpush1.bf16.msra.mxu0 %v529
  %731 = vmatprep.subr.bf16.mxu0 0
  %732 = vmatpush1.bf16.msra.mxu0 %v530
  %733 = vmatprep.subr.bf16.mxu0 0
  %734 = vmatpush1.bf16.msra.mxu0 %v531
  %735 = vmatprep.subr.bf16.mxu0 0
  %736 = vmatpush1.bf16.msra.mxu0 %v532
  %737 = vmatprep.subr.bf16.mxu0 0
  %738 = vmatpush1.bf16.msra.mxu0 %v533
  %739 = vmatprep.subr.bf16.mxu0 0
  %740 = vmatpush1.bf16.msra.mxu0 %v534
  %741 = vmatprep.subr.bf16.mxu0 0
  %742 = vmatpush1.bf16.msra.mxu0 %v535
  %743 = vmatprep.subr.bf16.mxu0 0
  %744 = vmatpush1.bf16.msra.mxu0 %v536
  %745 = vmatprep.subr.bf16.mxu0 0
  %746 = vmatpush1.bf16.msra.mxu0 %v537
  %747 = vmatprep.subr.bf16.mxu0 0
  %748 = vmatpush1.bf16.msra.mxu0 %v538
  %749 = vmatprep.subr.bf16.mxu0 0
  %750 = vmatpush1.bf16.msra.mxu0 %v539
  %751 = vmatprep.subr.bf16.mxu0 0
  %752 = vmatpush1.bf16.msra.mxu0 %v540
  %753 = vmatprep.subr.bf16.mxu0 0
  %754 = vmatpush1.bf16.msra.mxu0 %v541
  %755 = vmatprep.subr.bf16.mxu0 0
  %756 = vmatpush1.bf16.msra.mxu0 %v542
  %757 = vmatprep.subr.bf16.mxu0 0
  %758 = vmatpush1.bf16.msra.mxu0 %v543
  %759 = vmatprep.subr.bf16.mxu0 0
  %760 = vmatpush1.bf16.msra.mxu0 %v544
  %761 = vmatprep.mubr.bf16.mxu0 %v218
  %762 = vmatmul.mubr.bf16.gmra.mrb[0].mxu0 %v217
  %v763 = vpop.f32.mrb[0].mxu0
  %v764 = vadd.f32 %v724, %v763
  %v765 = vpop.f32.mrb[0].mxu0
  %v766 = vpop.f32.mrb[0].mxu0
  %v767 = vpop.f32.mrb[0].mxu0
  %768 = vdwg.mxu0
  %vm769 = vcmask 130048
  %v770 = vsel %vm769, %v37, -inf
  %771 = vmax.xlane.f32.xlu0 %v770
  %v772 = vpop.xlane.xlu0 %771
  %v773 = vsub.f32 %v37, %v772
  %v774 = vmul.f32 %v773, 1.442695
  %v775 = vpow.pop %v774
  %v776 = vsel %vm769, %v775, 0.0
  %777 = vadd.xlane.f32.xlu0 %v776
  %v778 = vpop.xlane.xlu0 %777
  %v779 = vrcp.pop %v778
  %v780 = vmul.f32 %v775, %v779
  %v781 = vsel %vm769, %v764, -inf
  %782 = vmax.xlane.f32.xlu0 %v781
  %v783 = vpop.xlane.xlu0 %782
  %v784 = vsub.f32 %v764, %v783
  %v785 = vmul.f32 %v784, 1.442695
  %v786 = vpow.pop %v785
  %v787 = vsel %vm769, %v786, 0.0
  %788 = vadd.xlane.f32.xlu0 %v787
  %v789 = vpop.xlane.xlu0 %788
  %v790 = vrcp.pop %v789
  %v791 = vmul.f32 %v786, %v790
  %v792 = vsub.f32 %v791, %v780
  %v793 = vpack.c.bf16 %v792, %v792
  %v795 = vsel %vm769, %v793, 0
  %v798 = vsel %vm769, %v481, 0
  %v801 = vsel %vm769, %v482, 0
  %v804 = vsel %vm769, %v483, 0
  %v807 = vsel %vm769, %v484, 0
  %v810 = vsel %vm769, %v485, 0
  %v813 = vsel %vm769, %v486, 0
  %v816 = vsel %vm769, %v487, 0
  %v819 = vsel %vm769, %v488, 0
  %v822 = vsel %vm769, %v489, 0
  %v825 = vsel %vm769, %v490, 0
  %v828 = vsel %vm769, %v491, 0
  %v831 = vsel %vm769, %v492, 0
  %v834 = vsel %vm769, %v493, 0
  %v837 = vsel %vm769, %v494, 0
  %v840 = vsel %vm769, %v495, 0
  %v843 = vsel %vm769, %v496, 0
  %v846 = vsel %vm769, %v497, 0
  %v849 = vsel %vm769, %v498, 0
  %v852 = vsel %vm769, %v499, 0
  %v855 = vsel %vm769, %v500, 0
  %v858 = vsel %vm769, %v501, 0
  %v861 = vsel %vm769, %v502, 0
  %v864 = vsel %vm769, %v503, 0
  %v867 = vsel %vm769, %v504, 0
  %v870 = vsel %vm769, %v505, 0
  %v873 = vsel %vm769, %v506, 0
  %v876 = vsel %vm769, %v507, 0
  %v879 = vsel %vm769, %v508, 0
  %v882 = vsel %vm769, %v509, 0
  %v885 = vsel %vm769, %v510, 0
  %v888 = vsel %vm769, %v511, 0
  %v891 = vsel %vm769, %v512, 0
  %v894 = vsel %vm769, %v513, 0
  %v897 = vsel %vm769, %v514, 0
  %v900 = vsel %vm769, %v515, 0
  %v903 = vsel %vm769, %v516, 0
  %v906 = vsel %vm769, %v517, 0
  %v909 = vsel %vm769, %v518, 0
  %v912 = vsel %vm769, %v519, 0
  %v915 = vsel %vm769, %v520, 0
  %v918 = vsel %vm769, %v521, 0
  %v921 = vsel %vm769, %v522, 0
  %v924 = vsel %vm769, %v523, 0
  %v927 = vsel %vm769, %v524, 0
  %v930 = vsel %vm769, %v525, 0
  %v933 = vsel %vm769, %v526, 0
  %v936 = vsel %vm769, %v527, 0
  %v939 = vsel %vm769, %v528, 0
  %v942 = vsel %vm769, %v529, 0
  %v945 = vsel %vm769, %v530, 0
  %v948 = vsel %vm769, %v531, 0
  %v951 = vsel %vm769, %v532, 0
  %v954 = vsel %vm769, %v533, 0
  %v957 = vsel %vm769, %v534, 0
  %v960 = vsel %vm769, %v535, 0
  %v963 = vsel %vm769, %v536, 0
  %v966 = vsel %vm769, %v537, 0
  %v969 = vsel %vm769, %v538, 0
  %v972 = vsel %vm769, %v539, 0
  %v975 = vsel %vm769, %v540, 0
  %v978 = vsel %vm769, %v541, 0
  %v981 = vsel %vm769, %v542, 0
  %v984 = vsel %vm769, %v543, 0
  %v987 = vsel %vm769, %v544, 0
  %989 = vmatprep.subr.bf16.mxu0 0
  %990 = vmatpush1.bf16.xpose.msra.mxu0 %v798
  %991 = vmatprep.subr.bf16.mxu0 0
  %992 = vmatpush1.bf16.xpose.msra.mxu0 %v801
  %993 = vmatprep.subr.bf16.mxu0 0
  %994 = vmatpush1.bf16.xpose.msra.mxu0 %v804
  %995 = vmatprep.subr.bf16.mxu0 0
  %996 = vmatpush1.bf16.xpose.msra.mxu0 %v807
  %997 = vmatprep.subr.bf16.mxu0 0
  %998 = vmatpush1.bf16.xpose.msra.mxu0 %v810
  %999 = vmatprep.subr.bf16.mxu0 0
  %1000 = vmatpush1.bf16.xpose.msra.mxu0 %v813
  %1001 = vmatprep.subr.bf16.mxu0 0
  %1002 = vmatpush1.bf16.xpose.msra.mxu0 %v816
  %1003 = vmatprep.subr.bf16.mxu0 0
  %1004 = vmatpush1.bf16.xpose.msra.mxu0 %v819
  %1005 = vmatprep.subr.bf16.mxu0 0
  %1006 = vmatpush1.bf16.xpose.msra.mxu0 %v822
  %1007 = vmatprep.subr.bf16.mxu0 0
  %1008 = vmatpush1.bf16.xpose.msra.mxu0 %v825
  %1009 = vmatprep.subr.bf16.mxu0 0
  %1010 = vmatpush1.bf16.xpose.msra.mxu0 %v828
  %1011 = vmatprep.subr.bf16.mxu0 0
  %1012 = vmatpush1.bf16.xpose.msra.mxu0 %v831
  %1013 = vmatprep.subr.bf16.mxu0 0
  %1014 = vmatpush1.bf16.xpose.msra.mxu0 %v834
  %1015 = vmatprep.subr.bf16.mxu0 0
  %1016 = vmatpush1.bf16.xpose.msra.mxu0 %v837
  %1017 = vmatprep.subr.bf16.mxu0 0
  %1018 = vmatpush1.bf16.xpose.msra.mxu0 %v840
  %1019 = vmatprep.subr.bf16.mxu0 0
  %1020 = vmatpush1.bf16.xpose.msra.mxu0 %v843
  %1021 = vmatprep.mubr.bf16.mxu0 0
  %1022 = vmatmul.mubr.bf16.gmra.mrb[0].mxu0 %v795
  %v1023 = vpop.f32.mrb[0].mxu0
  %v1024 = vadd.f32 0.0, %v1023
  %v1025 = vpop.f32.mrb[0].mxu0
  %v1026 = vadd.f32 0.0, %v1025
  %v1027 = vpop.f32.mrb[0].mxu0
  %v1028 = vpop.f32.mrb[0].mxu0
  %1029 = vdwg.mxu0
  %1030 = vmatprep.subr.bf16.mxu0 0
  %1031 = vmatpush1.bf16.xpose.msra.mxu0 %v846
  %1032 = vmatprep.subr.bf16.mxu0 0
  %1033 = vmatpush1.bf16.xpose.msra.mxu0 %v849
  %1034 = vmatprep.subr.bf16.mxu0 0
  %1035 = vmatpush1.bf16.xpose.msra.mxu0 %v852
  %1036 = vmatprep.subr.bf16.mxu0 0
  %1037 = vmatpush1.bf16.xpose.msra.mxu0 %v855
  %1038 = vmatprep.subr.bf16.mxu0 0
  %1039 = vmatpush1.bf16.xpose.msra.mxu0 %v858
  %1040 = vmatprep.subr.bf16.mxu0 0
  %1041 = vmatpush1.bf16.xpose.msra.mxu0 %v861
  %1042 = vmatprep.subr.bf16.mxu0 0
  %1043 = vmatpush1.bf16.xpose.msra.mxu0 %v864
  %1044 = vmatprep.subr.bf16.mxu0 0
  %1045 = vmatpush1.bf16.xpose.msra.mxu0 %v867
  %1046 = vmatprep.subr.bf16.mxu0 0
  %1047 = vmatpush1.bf16.xpose.msra.mxu0 %v870
  %1048 = vmatprep.subr.bf16.mxu0 0
  %1049 = vmatpush1.bf16.xpose.msra.mxu0 %v873
  %1050 = vmatprep.subr.bf16.mxu0 0
  %1051 = vmatpush1.bf16.xpose.msra.mxu0 %v876
  %1052 = vmatprep.subr.bf16.mxu0 0
  %1053 = vmatpush1.bf16.xpose.msra.mxu0 %v879
  %1054 = vmatprep.subr.bf16.mxu0 0
  %1055 = vmatpush1.bf16.xpose.msra.mxu0 %v882
  %1056 = vmatprep.subr.bf16.mxu0 0
  %1057 = vmatpush1.bf16.xpose.msra.mxu0 %v885
  %1058 = vmatprep.subr.bf16.mxu0 0
  %1059 = vmatpush1.bf16.xpose.msra.mxu0 %v888
  %1060 = vmatprep.subr.bf16.mxu0 0
  %1061 = vmatpush1.bf16.xpose.msra.mxu0 %v891
  %1062 = vmatprep.mubr.bf16.mxu0 0
  %1063 = vmatmul.mubr.bf16.gmra.mrb[0].mxu0 %v795
  %v1064 = vpop.f32.mrb[0].mxu0
  %v1065 = vadd.f32 0.0, %v1064
  %v1066 = vpop.f32.mrb[0].mxu0
  %v1067 = vadd.f32 0.0, %v1066
  %v1068 = vpop.f32.mrb[0].mxu0
  %v1069 = vpop.f32.mrb[0].mxu0
  %1070 = vdwg.mxu0
  %1071 = vmatprep.subr.bf16.mxu0 0
  %1072 = vmatpush1.bf16.xpose.msra.mxu0 %v894
  %1073 = vmatprep.subr.bf16.mxu0 0
  %1074 = vmatpush1.bf16.xpose.msra.mxu0 %v897
  %1075 = vmatprep.subr.bf16.mxu0 0
  %1076 = vmatpush1.bf16.xpose.msra.mxu0 %v900
  %1077 = vmatprep.subr.bf16.mxu0 0
  %1078 = vmatpush1.bf16.xpose.msra.mxu0 %v903
  %1079 = vmatprep.subr.bf16.mxu0 0
  %1080 = vmatpush1.bf16.xpose.msra.mxu0 %v906
  %1081 = vmatprep.subr.bf16.mxu0 0
  %1082 = vmatpush1.bf16.xpose.msra.mxu0 %v909
  %1083 = vmatprep.subr.bf16.mxu0 0
  %1084 = vmatpush1.bf16.xpose.msra.mxu0 %v912
  %1085 = vmatprep.subr.bf16.mxu0 0
  %1086 = vmatpush1.bf16.xpose.msra.mxu0 %v915
  %1087 = vmatprep.subr.bf16.mxu0 0
  %1088 = vmatpush1.bf16.xpose.msra.mxu0 %v918
  %1089 = vmatprep.subr.bf16.mxu0 0
  %1090 = vmatpush1.bf16.xpose.msra.mxu0 %v921
  %1091 = vmatprep.subr.bf16.mxu0 0
  %1092 = vmatpush1.bf16.xpose.msra.mxu0 %v924
  %1093 = vmatprep.subr.bf16.mxu0 0
  %1094 = vmatpush1.bf16.xpose.msra.mxu0 %v927
  %1095 = vmatprep.subr.bf16.mxu0 0
  %1096 = vmatpush1.bf16.xpose.msra.mxu0 %v930
  %1097 = vmatprep.subr.bf16.mxu0 0
  %1098 = vmatpush1.bf16.xpose.msra.mxu0 %v933
  %1099 = vmatprep.subr.bf16.mxu0 0
  %1100 = vmatpush1.bf16.xpose.msra.mxu0 %v936
  %1101 = vmatprep.subr.bf16.mxu0 0
  %1102 = vmatpush1.bf16.xpose.msra.mxu0 %v939
  %1103 = vmatprep.mubr.bf16.mxu0 0
  %1104 = vmatmul.mubr.bf16.gmra.mrb[0].mxu0 %v795
  %v1105 = vpop.f32.mrb[0].mxu0
  %v1106 = vadd.f32 0.0, %v1105
  %v1107 = vpop.f32.mrb[0].mxu0
  %v1108 = vadd.f32 0.0, %v1107
  %v1109 = vpop.f32.mrb[0].mxu0
  %v1110 = vpop.f32.mrb[0].mxu0
  %1111 = vdwg.mxu0
  %1112 = vmatprep.subr.bf16.mxu0 0
  %1113 = vmatpush1.bf16.xpose.msra.mxu0 %v942
  %1114 = vmatprep.subr.bf16.mxu0 0
  %1115 = vmatpush1.bf16.xpose.msra.mxu0 %v945
  %1116 = vmatprep.subr.bf16.mxu0 0
  %1117 = vmatpush1.bf16.xpose.msra.mxu0 %v948
  %1118 = vmatprep.subr.bf16.mxu0 0
  %1119 = vmatpush1.bf16.xpose.msra.mxu0 %v951
  %1120 = vmatprep.subr.bf16.mxu0 0
  %1121 = vmatpush1.bf16.xpose.msra.mxu0 %v954
  %1122 = vmatprep.subr.bf16.mxu0 0
  %1123 = vmatpush1.bf16.xpose.msra.mxu0 %v957
  %1124 = vmatprep.subr.bf16.mxu0 0
  %1125 = vmatpush1.bf16.xpose.msra.mxu0 %v960
  %1126 = vmatprep.subr.bf16.mxu0 0
  %1127 = vmatpush1.bf16.xpose.msra.mxu0 %v963
  %1128 = vmatprep.subr.bf16.mxu0 0
  %1129 = vmatpush1.bf16.xpose.msra.mxu0 %v966
  %1130 = vmatprep.subr.bf16.mxu0 0
  %1131 = vmatpush1.bf16.xpose.msra.mxu0 %v969
  %1132 = vmatprep.subr.bf16.mxu0 0
  %1133 = vmatpush1.bf16.xpose.msra.mxu0 %v972
  %1134 = vmatprep.subr.bf16.mxu0 0
  %1135 = vmatpush1.bf16.xpose.msra.mxu0 %v975
  %1136 = vmatprep.subr.bf16.mxu0 0
  %1137 = vmatpush1.bf16.xpose.msra.mxu0 %v978
  %1138 = vmatprep.subr.bf16.mxu0 0
  %1139 = vmatpush1.bf16.xpose.msra.mxu0 %v981
  %1140 = vmatprep.subr.bf16.mxu0 0
  %1141 = vmatpush1.bf16.xpose.msra.mxu0 %v984
  %1142 = vmatprep.subr.bf16.mxu0 0
  %1143 = vmatpush1.bf16.xpose.msra.mxu0 %v987
  %1144 = vmatprep.mubr.bf16.mxu0 0
  %1145 = vmatmul.mubr.bf16.gmra.mrb[0].mxu0 %v795
  %v1146 = vpop.f32.mrb[0].mxu0
  %v1147 = vadd.f32 0.0, %v1146
  %v1148 = vpop.f32.mrb[0].mxu0
  %v1149 = vadd.f32 0.0, %v1148
  %v1150 = vpop.f32.mrb[0].mxu0
  %v1151 = vpop.f32.mrb[0].mxu0
  %1152 = vdwg.mxu0
  %v1153 = vmul.f32 %v1024, %v1024
  %v1154 = vmul.f32 %v1026, %v1026
  %v1155 = vmul.f32 %v1065, %v1065
  %v1156 = vmul.f32 %v1067, %v1067
  %v1157 = vmul.f32 %v1106, %v1106
  %v1158 = vmul.f32 %v1108, %v1108
  %v1159 = vmul.f32 %v1147, %v1147
  %v1160 = vmul.f32 %v1149, %v1149
  %v1161 = vadd.f32 %v1153, %v1154
  %v1162 = vadd.f32 %v1161, %v1155
  %v1163 = vadd.f32 %v1162, %v1156
  %v1164 = vadd.f32 %v1163, %v1157
  %v1165 = vadd.f32 %v1164, %v1158
  %v1166 = vadd.f32 %v1165, %v1159
  %v1167 = vadd.f32 %v1166, %v1160
  %1168 = vadd.xlane.f32.xlu0 %v1167
  %v1169 = vpop.xlane.xlu0 %1168
  %v1170 = vmax.f32 %v1169, 1e-24
  %v1171 = vrsqrt.pop %v1170
  %v1172 = vmul.f32 %v1171, 12.25
  %v1173 = vmul.f32 %v1024, %v1172
  %v1174 = vmul.f32 %v1026, %v1172
  %v1175 = vmul.f32 %v1065, %v1172
  %v1176 = vmul.f32 %v1067, %v1172
  %v1177 = vmul.f32 %v1106, %v1172
  %v1178 = vmul.f32 %v1108, %v1172
  %v1179 = vmul.f32 %v1147, %v1172
  %v1180 = vmul.f32 %v1149, %v1172
  %v1181 = vadd.f32 %v21, %v1173
  %v1182 = vadd.f32 %v22, %v1174
  %v1183 = vadd.f32 %v23, %v1175
  %v1184 = vadd.f32 %v24, %v1176
  %v1185 = vadd.f32 %v25, %v1177
  %v1186 = vadd.f32 %v26, %v1178
  %v1187 = vadd.f32 %v27, %v1179
  %v1188 = vadd.f32 %v28, %v1180
  %v1189 = vpack.c.bf16 %v1181, %v1181
  %v1190 = vpack.c.bf16 %v1182, %v1182
  %v1191 = vpack.c.bf16 %v1183, %v1183
  %v1192 = vpack.c.bf16 %v1184, %v1184
  %v1193 = vpack.c.bf16 %v1185, %v1185
  %v1194 = vpack.c.bf16 %v1186, %v1186
  %v1195 = vpack.c.bf16 %v1187, %v1187
  %v1196 = vpack.c.bf16 %v1188, %v1188
  %1197 = vmatprep.subr.bf16.mxu0 0
  %1198 = vmatpush1.bf16.msra.mxu0 %v481
  %1199 = vmatprep.subr.bf16.mxu0 0
  %1200 = vmatpush1.bf16.msra.mxu0 %v482
  %1201 = vmatprep.subr.bf16.mxu0 0
  %1202 = vmatpush1.bf16.msra.mxu0 %v483
  %1203 = vmatprep.subr.bf16.mxu0 0
  %1204 = vmatpush1.bf16.msra.mxu0 %v484
  %1205 = vmatprep.subr.bf16.mxu0 0
  %1206 = vmatpush1.bf16.msra.mxu0 %v485
  %1207 = vmatprep.subr.bf16.mxu0 0
  %1208 = vmatpush1.bf16.msra.mxu0 %v486
  %1209 = vmatprep.subr.bf16.mxu0 0
  %1210 = vmatpush1.bf16.msra.mxu0 %v487
  %1211 = vmatprep.subr.bf16.mxu0 0
  %1212 = vmatpush1.bf16.msra.mxu0 %v488
  %1213 = vmatprep.subr.bf16.mxu0 0
  %1214 = vmatpush1.bf16.msra.mxu0 %v489
  %1215 = vmatprep.subr.bf16.mxu0 0
  %1216 = vmatpush1.bf16.msra.mxu0 %v490
  %1217 = vmatprep.subr.bf16.mxu0 0
  %1218 = vmatpush1.bf16.msra.mxu0 %v491
  %1219 = vmatprep.subr.bf16.mxu0 0
  %1220 = vmatpush1.bf16.msra.mxu0 %v492
  %1221 = vmatprep.subr.bf16.mxu0 0
  %1222 = vmatpush1.bf16.msra.mxu0 %v493
  %1223 = vmatprep.subr.bf16.mxu0 0
  %1224 = vmatpush1.bf16.msra.mxu0 %v494
  %1225 = vmatprep.subr.bf16.mxu0 0
  %1226 = vmatpush1.bf16.msra.mxu0 %v495
  %1227 = vmatprep.subr.bf16.mxu0 0
  %1228 = vmatpush1.bf16.msra.mxu0 %v496
  %1229 = vmatprep.mubr.bf16.mxu0 %v1190
  %1230 = vmatmul.mubr.bf16.gmra.mrb[0].mxu0 %v1189
  %v1231 = vpop.f32.mrb[0].mxu0
  %v1232 = vadd.f32 %v223, %v1231
  %v1233 = vpop.f32.mrb[0].mxu0
  %v1234 = vpop.f32.mrb[0].mxu0
  %v1235 = vpop.f32.mrb[0].mxu0
  %1236 = vdwg.mxu0
  %1237 = vmatprep.subr.bf16.mxu0 0
  %1238 = vmatpush1.bf16.msra.mxu0 %v497
  %1239 = vmatprep.subr.bf16.mxu0 0
  %1240 = vmatpush1.bf16.msra.mxu0 %v498
  %1241 = vmatprep.subr.bf16.mxu0 0
  %1242 = vmatpush1.bf16.msra.mxu0 %v499
  %1243 = vmatprep.subr.bf16.mxu0 0
  %1244 = vmatpush1.bf16.msra.mxu0 %v500
  %1245 = vmatprep.subr.bf16.mxu0 0
  %1246 = vmatpush1.bf16.msra.mxu0 %v501
  %1247 = vmatprep.subr.bf16.mxu0 0
  %1248 = vmatpush1.bf16.msra.mxu0 %v502
  %1249 = vmatprep.subr.bf16.mxu0 0
  %1250 = vmatpush1.bf16.msra.mxu0 %v503
  %1251 = vmatprep.subr.bf16.mxu0 0
  %1252 = vmatpush1.bf16.msra.mxu0 %v504
  %1253 = vmatprep.subr.bf16.mxu0 0
  %1254 = vmatpush1.bf16.msra.mxu0 %v505
  %1255 = vmatprep.subr.bf16.mxu0 0
  %1256 = vmatpush1.bf16.msra.mxu0 %v506
  %1257 = vmatprep.subr.bf16.mxu0 0
  %1258 = vmatpush1.bf16.msra.mxu0 %v507
  %1259 = vmatprep.subr.bf16.mxu0 0
  %1260 = vmatpush1.bf16.msra.mxu0 %v508
  %1261 = vmatprep.subr.bf16.mxu0 0
  %1262 = vmatpush1.bf16.msra.mxu0 %v509
  %1263 = vmatprep.subr.bf16.mxu0 0
  %1264 = vmatpush1.bf16.msra.mxu0 %v510
  %1265 = vmatprep.subr.bf16.mxu0 0
  %1266 = vmatpush1.bf16.msra.mxu0 %v511
  %1267 = vmatprep.subr.bf16.mxu0 0
  %1268 = vmatpush1.bf16.msra.mxu0 %v512
  %1269 = vmatprep.mubr.bf16.mxu0 %v1192
  %1270 = vmatmul.mubr.bf16.gmra.mrb[0].mxu0 %v1191
  %v1271 = vpop.f32.mrb[0].mxu0
  %v1272 = vadd.f32 %v1232, %v1271
  %v1273 = vpop.f32.mrb[0].mxu0
  %v1274 = vpop.f32.mrb[0].mxu0
  %v1275 = vpop.f32.mrb[0].mxu0
  %1276 = vdwg.mxu0
  %1277 = vmatprep.subr.bf16.mxu0 0
  %1278 = vmatpush1.bf16.msra.mxu0 %v513
  %1279 = vmatprep.subr.bf16.mxu0 0
  %1280 = vmatpush1.bf16.msra.mxu0 %v514
  %1281 = vmatprep.subr.bf16.mxu0 0
  %1282 = vmatpush1.bf16.msra.mxu0 %v515
  %1283 = vmatprep.subr.bf16.mxu0 0
  %1284 = vmatpush1.bf16.msra.mxu0 %v516
  %1285 = vmatprep.subr.bf16.mxu0 0
  %1286 = vmatpush1.bf16.msra.mxu0 %v517
  %1287 = vmatprep.subr.bf16.mxu0 0
  %1288 = vmatpush1.bf16.msra.mxu0 %v518
  %1289 = vmatprep.subr.bf16.mxu0 0
  %1290 = vmatpush1.bf16.msra.mxu0 %v519
  %1291 = vmatprep.subr.bf16.mxu0 0
  %1292 = vmatpush1.bf16.msra.mxu0 %v520
  %1293 = vmatprep.subr.bf16.mxu0 0
  %1294 = vmatpush1.bf16.msra.mxu0 %v521
  %1295 = vmatprep.subr.bf16.mxu0 0
  %1296 = vmatpush1.bf16.msra.mxu0 %v522
  %1297 = vmatprep.subr.bf16.mxu0 0
  %1298 = vmatpush1.bf16.msra.mxu0 %v523
  %1299 = vmatprep.subr.bf16.mxu0 0
  %1300 = vmatpush1.bf16.msra.mxu0 %v524
  %1301 = vmatprep.subr.bf16.mxu0 0
  %1302 = vmatpush1.bf16.msra.mxu0 %v525
  %1303 = vmatprep.subr.bf16.mxu0 0
  %1304 = vmatpush1.bf16.msra.mxu0 %v526
  %1305 = vmatprep.subr.bf16.mxu0 0
  %1306 = vmatpush1.bf16.msra.mxu0 %v527
  %1307 = vmatprep.subr.bf16.mxu0 0
  %1308 = vmatpush1.bf16.msra.mxu0 %v528
  %1309 = vmatprep.mubr.bf16.mxu0 %v1194
  %1310 = vmatmul.mubr.bf16.gmra.mrb[0].mxu0 %v1193
  %v1311 = vpop.f32.mrb[0].mxu0
  %v1312 = vadd.f32 %v1272, %v1311
  %v1313 = vpop.f32.mrb[0].mxu0
  %v1314 = vpop.f32.mrb[0].mxu0
  %v1315 = vpop.f32.mrb[0].mxu0
  %1316 = vdwg.mxu0
  %1317 = vmatprep.subr.bf16.mxu0 0
  %1318 = vmatpush1.bf16.msra.mxu0 %v529
  %1319 = vmatprep.subr.bf16.mxu0 0
  %1320 = vmatpush1.bf16.msra.mxu0 %v530
  %1321 = vmatprep.subr.bf16.mxu0 0
  %1322 = vmatpush1.bf16.msra.mxu0 %v531
  %1323 = vmatprep.subr.bf16.mxu0 0
  %1324 = vmatpush1.bf16.msra.mxu0 %v532
  %1325 = vmatprep.subr.bf16.mxu0 0
  %1326 = vmatpush1.bf16.msra.mxu0 %v533
  %1327 = vmatprep.subr.bf16.mxu0 0
  %1328 = vmatpush1.bf16.msra.mxu0 %v534
  %1329 = vmatprep.subr.bf16.mxu0 0
  %1330 = vmatpush1.bf16.msra.mxu0 %v535
  %1331 = vmatprep.subr.bf16.mxu0 0
  %1332 = vmatpush1.bf16.msra.mxu0 %v536
  %1333 = vmatprep.subr.bf16.mxu0 0
  %1334 = vmatpush1.bf16.msra.mxu0 %v537
  %1335 = vmatprep.subr.bf16.mxu0 0
  %1336 = vmatpush1.bf16.msra.mxu0 %v538
  %1337 = vmatprep.subr.bf16.mxu0 0
  %1338 = vmatpush1.bf16.msra.mxu0 %v539
  %1339 = vmatprep.subr.bf16.mxu0 0
  %1340 = vmatpush1.bf16.msra.mxu0 %v540
  %1341 = vmatprep.subr.bf16.mxu0 0
  %1342 = vmatpush1.bf16.msra.mxu0 %v541
  %1343 = vmatprep.subr.bf16.mxu0 0
  %1344 = vmatpush1.bf16.msra.mxu0 %v542
  %1345 = vmatprep.subr.bf16.mxu0 0
  %1346 = vmatpush1.bf16.msra.mxu0 %v543
  %1347 = vmatprep.subr.bf16.mxu0 0
  %1348 = vmatpush1.bf16.msra.mxu0 %v544
  %1349 = vmatprep.mubr.bf16.mxu0 %v1196
  %1350 = vmatmul.mubr.bf16.gmra.mrb[0].mxu0 %v1195
  %v1351 = vpop.f32.mrb[0].mxu0
  %v1352 = vadd.f32 %v1312, %v1351
  %v1353 = vpop.f32.mrb[0].mxu0
  %v1354 = vpop.f32.mrb[0].mxu0
  %v1355 = vpop.f32.mrb[0].mxu0
  %1356 = vdwg.mxu0
  %v1357 = vsel %vm769, %v1352, -inf
  %1358 = vmax.xlane.f32.xlu0 %v1357
  %v1359 = vpop.xlane.xlu0 %1358
  %v1360 = vsub.f32 %v1352, %v1359
  %v1361 = vmul.f32 %v1360, 1.442695
  %v1362 = vpow.pop %v1361
  %v1363 = vsel %vm769, %v1362, 0.0
  %1364 = vadd.xlane.f32.xlu0 %v1363
  %v1365 = vpop.xlane.xlu0 %1364
  %v1366 = vlog2.pop %v1365
  %v1367 = vmul.f32 %v1366, 0.6931472
  %v1368 = vsub.f32 %v1360, %v1367
  %v1369 = vmul.f32 %v1368, %v780
  %v1370 = vsel %vm769, %v1369, 0.0
  %1371 = vadd.xlane.f32.xlu0 %v1370
  %v1372 = vpop.xlane.xlu0 %1371
  %v1373 = vsub.f32 0.0, %v1372
  %v1374 = vmul.f32 %v1373, %v174
  %vm1375 = vcmask 7168
  %1376 = vst.msk [vmem:[%s5] sm:$0xff] %vm1375, %v1374
  // Predicated region
  $region22: #{tpu_custom_call.1} parent=0 // pred_check
    _
  $region23: #{tpu_custom_call.1} parent=0 // pred_check_branch
    %1378 = sbr.rel (0) target = $region25
  $region24: #{tpu_custom_call.1} parent=0 // pred_region
    _
  $region25: #{tpu_custom_call.1} parent=0 // pred_fallthru
    _
  // Predicated region
  $region26: #{tpu_custom_call.1} parent=0 // pred_check
    _
  $region27: #{tpu_custom_call.1} parent=0 // pred_check_branch
    %1380 = sbr.rel (0) target = $region29
  $region28: #{tpu_custom_call.1} parent=0 // pred_region
    _
  $region29: #{tpu_custom_call.1} parent=0 // pred_fallthru
    _

</llo_original>
